<compile_context>
chip_gen: v5e
topology: v5e:2x2
jax: 0.10.0
libtpu: 0.0.40
codegen_flags: <defaults>
</compile_context>

<pallas_src>
import jax
import jax.numpy as jnp
from jax.experimental import pallas as pl
from jax.experimental.pallas import tpu as pltpu


def scam_kernel(p_ref, w1_ref, b1_ref, w2_ref, b2_ref, out_ref):
    # p_ref : (KP, T_HW)    bf16  im2col patches (lane-dense spatial tile)
    # w1_ref: (c1p, KP)     bf16  block-diagonal branch weight, BN scale folded
    # b1    : (c1p, 1)      f32   folded-BN bias (branches)
    # w2_ref: (cinp, c1p)   bf16  1x1 projection weight, BN scale folded
    # b2    : (cinp, 1)     f32   folded-BN bias (projection)
    # out   : (cinp, T_HW)  f32
    h = jnp.dot(w1_ref[...], p_ref[...], preferred_element_type=jnp.float32)
    h = jnp.maximum(h + b1_ref[...], 0.0)                     # BN(eval) bias + ReLU
    o = jnp.dot(w2_ref[...], h.astype(jnp.bfloat16),          # bf16 MXU matmul
                preferred_element_type=jnp.float32)
    out_ref[...] = jnp.maximum(o + b2_ref[...], 0.0)


def _round_up(x, m):
    return (x + m - 1) // m * m


def scam_forward(x, params, rates):
    """x: (N, H, W, Cin) f32 NHWC.  Returns (N, H, W, Cin) f32."""
    N, H, W, cin = x.shape
    wb = params["w_branches"]                      # (nb, 3, 3, cin, cout) f32
    nb, cout = wb.shape[0], wb.shape[-1]
    c1 = nb * cout
    HW = H * W
    K = nb * 9 * cin
    KP = _round_up(K, 16)                          # 180 -> 192 (bf16 sublane tile)
    c1p = _round_up(c1, 16)                        # 40  -> 48
    cinp = _round_up(cin, 8)                       # 4   -> 8
    pad = max(rates)

    # HW (lane) tiling: cap tile at 2048 lanes; whole-HW tile for small images.
    t_hw = 2048
    if HW <= t_hw:
        t_hw = _round_up(HW, 128)
    HWP = _round_up(HW, t_hw)
    n_hw = HWP // t_hw

    # ---- wrapper-side im2col, channel-major (no big-tensor transpose) ----
    xc = jnp.transpose(x.astype(jnp.bfloat16), (0, 3, 1, 2))   # (N, Cin, H, W)
    xpad = jnp.pad(xc, ((0, 0), (0, 0), (pad, pad), (pad, pad)))
    rows = []
    for r in rates:                                # K ordering: (branch, ky, kx, cin)
        for ky in range(3):
            for kx in range(3):
                oh = pad + (ky - 1) * r
                ow = pad + (kx - 1) * r
                rows.append(
                    xpad[:, :, oh:oh + H, ow:ow + W].reshape(N, cin, HW))
    patches = jnp.concatenate(rows, axis=1)        # (N, K, HW) lane-dense
    patches = jnp.pad(patches, ((0, 0), (0, KP - K), (0, HWP - HW)))

    # ---- weights: fold BN(eval) scale in f32, then cast to bf16 ----
    sb = params["scale_branches"].astype(jnp.float32)   # (nb, cout)
    bb = params["bias_branches"].astype(jnp.float32)    # (nb, cout)
    w1 = jnp.zeros((KP, c1p), jnp.float32)
    for b in range(nb):
        blk = wb[b].reshape(9 * cin, cout).astype(jnp.float32) * sb[b][None, :]
        w1 = w1.at[b * 9 * cin:(b + 1) * 9 * cin,
                   b * cout:(b + 1) * cout].set(blk)
    w1_t = w1.T.astype(jnp.bfloat16)                     # (c1p, KP)
    b1 = jnp.zeros((c1p, 1), jnp.float32).at[:c1, 0].set(bb.reshape(c1))

    wp = params["w_project"].astype(jnp.float32)         # (c1, cin)
    sp = params["scale_project"].astype(jnp.float32)     # (cin,)
    bp = params["bias_project"].astype(jnp.float32)      # (cin,)
    w2 = jnp.zeros((c1p, cinp), jnp.float32).at[:c1, :cin].set(wp * sp[None, :])
    w2_t = w2.T.astype(jnp.bfloat16)                     # (cinp, c1p)
    b2 = jnp.zeros((cinp, 1), jnp.float32).at[:cin, 0].set(bp)

    # ---- explicit VMEM budget (double-buffered I/O tiles + resident weights) ----
    vmem_need = (2 * (KP * t_hw * 2 + cinp * t_hw * 4)
                 + c1p * KP * 2 + cinp * c1p * 2
                 + (c1p + cinp) * 4
                 + 2 * c1p * t_hw * 4)
    vmem_limit = int(min(64 * 1024 * 1024, max(2 * vmem_need, 16 * 1024 * 1024)))

    out_t = pl.pallas_call(
        scam_kernel,
        out_shape=jax.ShapeDtypeStruct((N, cinp, HWP), jnp.float32),
        grid=(N, n_hw),
        in_specs=[
            pl.BlockSpec((None, KP, t_hw), lambda n, j: (n, 0, j)),   # patches
            pl.BlockSpec(w1_t.shape, lambda n, j: (0, 0)),            # resident
            pl.BlockSpec(b1.shape, lambda n, j: (0, 0)),
            pl.BlockSpec(w2_t.shape, lambda n, j: (0, 0)),
            pl.BlockSpec(b2.shape, lambda n, j: (0, 0)),
        ],
        out_specs=pl.BlockSpec((None, cinp, t_hw), lambda n, j: (n, 0, j)),
        compiler_params=pltpu.CompilerParams(
            dimension_semantics=("parallel", "parallel"),
            vmem_limit_bytes=vmem_limit),
    )(patches, w1_t, b1, w2_t, b2)

    out = jnp.swapaxes(out_t[:, :cin, :HW], 1, 2).reshape(N, H, W, cin)
    return out


def reference(x, params, rates):
    """Plain-JAX reference matching the PyTorch forward (eval mode), with
    BN(eval) folded into the conv weights and the same bf16 storage of
    inputs / weights / concat intermediate that the kernel uses."""
    wb = params["w_branches"]
    sb = params["scale_branches"]
    bb = params["bias_branches"]
    wp = params["w_project"]
    sp = params["scale_project"]
    bp = params["bias_project"]
    q = lambda a: a.astype(jnp.bfloat16).astype(jnp.float32)
    xq = q(x)
    feats = []
    for i, r in enumerate(rates):
        w_eff = q(wb[i] * sb[i])                       # fold in f32, then bf16 round
        y = jax.lax.conv_general_dilated(
            xq, w_eff, window_strides=(1, 1), padding=[(r, r), (r, r)],
            rhs_dilation=(r, r), dimension_numbers=("NHWC", "HWIO", "NHWC"))
        feats.append(jnp.maximum(y + bb[i], 0.0))
    cat = q(jnp.concatenate(feats, axis=-1))           # kernel casts h to bf16
    y = jnp.einsum("nhwc,cd->nhwd", cat, q(wp * sp[None, :]))
    return jnp.maximum(y + bp, 0.0)


if __name__ == "__main__":
    N, H, W = 2, 16, 16
    CIN, COUT = 4, 8
    RATES = (1, 2, 3, 4, 5)
    EPS = 1e-5

    key = jax.random.PRNGKey(0)
    ks = jax.random.split(key, 12)

    x = jax.random.normal(ks[0], (N, H, W, CIN), jnp.float32)

    # Branch conv weights: [5, kh, kw, Cin, Cout]
    wb = jax.random.normal(ks[1], (5, 3, 3, CIN, COUT), jnp.float32) * 0.2
    # Branch BN params (BatchNorm2d over Cout), eval mode with synthetic stats.
    gamma_b = 1.0 + 0.1 * jax.random.normal(ks[2], (5, COUT), jnp.float32)
    beta_b = 0.1 * jax.random.normal(ks[3], (5, COUT), jnp.float32)
    mean_b = 0.1 * jax.random.normal(ks[4], (5, COUT), jnp.float32)
    var_b = 0.5 + jax.random.uniform(ks[5], (5, COUT), jnp.float32)

    # Project: 1x1 conv (5*Cout -> Cin), stored as matmul weight [5*Cout, Cin]
    wp = jax.random.normal(ks[6], (5 * COUT, CIN), jnp.float32) * 0.2
    gamma_p = 1.0 + 0.1 * jax.random.normal(ks[7], (CIN,), jnp.float32)
    beta_p = 0.1 * jax.random.normal(ks[8], (CIN,), jnp.float32)
    mean_p = 0.1 * jax.random.normal(ks[9], (CIN,), jnp.float32)
    var_p = 0.5 + jax.random.uniform(ks[10], (CIN,), jnp.float32)

    # Fold BatchNorm (eval) into per-channel scale / bias.
    scale_b = gamma_b / jnp.sqrt(var_b + EPS)          # (5, Cout)
    bias_b = beta_b - mean_b * scale_b                 # (5, Cout)
    scale_p = gamma_p / jnp.sqrt(var_p + EPS)          # (Cin,)
    bias_p = beta_p - mean_p * scale_p                 # (Cin,)

    params = dict(
        w_branches=wb,
        scale_branches=scale_b,
        bias_branches=bias_b,
        w_project=wp,
        scale_project=scale_p,
        bias_project=bias_p,
    )

    fwd = jax.jit(lambda xx, pp: scam_forward(xx, pp, RATES))
    out = jax.block_until_ready(fwd(x, params))
    ref = jax.block_until_ready(reference(x, params, RATES))

    assert out.shape == (N, H, W, CIN), out.shape
    err = jnp.max(jnp.abs(out - ref))
    assert jnp.allclose(out, ref, atol=2e-3, rtol=2e-3), f"max abs err {err}"

    print("KERNEL_OK")
</pallas_src>

<mosaic_0001>
module attributes {stable_mosaic.version = 11 : i64} {
  func.func @scam_kernel(%arg0: i32, %arg1: i32, %arg2: memref<1x192x256xbf16, #tpu.memory_space<vmem>>, %arg3: memref<48x192xbf16, #tpu.memory_space<vmem>>, %arg4: memref<48x1xf32, #tpu.memory_space<vmem>>, %arg5: memref<8x48xbf16, #tpu.memory_space<vmem>>, %arg6: memref<8x1xf32, #tpu.memory_space<vmem>>, %arg7: memref<1x8x256xf32, #tpu.memory_space<vmem>>) attributes {dimension_semantics = [#tpu.dimension_semantics<parallel>, #tpu.dimension_semantics<parallel>], iteration_bounds = array<i64: 2, 1>, scalar_prefetch = 0 : i64, scratch_operands = 0 : i64, tpu.core_type = #tpu.core_type<tc>, window_params = [{transform_indices = @transform_0, window_bounds = array<i64: 1, 192, 256>}, {pipeline_mode = #tpu.pipeline_mode<synchronous>, transform_indices = @transform_1, window_bounds = array<i64: 48, 192>}, {pipeline_mode = #tpu.pipeline_mode<synchronous>, transform_indices = @transform_2, window_bounds = array<i64: 48, 1>}, {pipeline_mode = #tpu.pipeline_mode<synchronous>, transform_indices = @transform_3, window_bounds = array<i64: 8, 48>}, {pipeline_mode = #tpu.pipeline_mode<synchronous>, transform_indices = @transform_4, window_bounds = array<i64: 8, 1>}, {transform_indices = @transform_5, window_bounds = array<i64: 1, 8, 256>}]} {
    %c0 = arith.constant 0 : index
    %c0_0 = arith.constant 0 : index
    %0 = vector.load %arg3[%c0, %c0_0] : memref<48x192xbf16, #tpu.memory_space<vmem>>, vector<48x192xbf16>
    %c0_1 = arith.constant 0 : index
    %c0_2 = arith.constant 0 : index
    %c0_3 = arith.constant 0 : index
    %1 = vector.load %arg2[%c0_1, %c0_2, %c0_3] : memref<1x192x256xbf16, #tpu.memory_space<vmem>>, vector<1x192x256xbf16>
    %2 = vector.shape_cast %1 : vector<1x192x256xbf16> to vector<192x256xbf16>
    %cst = arith.constant dense<0.000000e+00> : vector<48x256xf32>
    %3 = tpu.matmul %0, %2, %cst {dimension_numbers = #tpu.dot_dimension_numbers<[1], [0], [0], [1], [0, 0, 1, 1], [], []>} : vector<48x192xbf16>, vector<192x256xbf16>, vector<48x256xf32> -> vector<48x256xf32>
    %c0_4 = arith.constant 0 : index
    %c0_5 = arith.constant 0 : index
    %4 = vector.load %arg4[%c0_4, %c0_5] : memref<48x1xf32, #tpu.memory_space<vmem>>, vector<48x1xf32>
    %5 = vector.broadcast %4 : vector<48x1xf32> to vector<48x256xf32>
    %6 = arith.addf %3, %5 : vector<48x256xf32>
    %cst_6 = arith.constant 0.000000e+00 : f32
    %7 = vector.broadcast %cst_6 : f32 to vector<48x256xf32>
    %8 = arith.maximumf %6, %7 : vector<48x256xf32>
    %c0_7 = arith.constant 0 : index
    %c0_8 = arith.constant 0 : index
    %9 = vector.load %arg5[%c0_7, %c0_8] : memref<8x48xbf16, #tpu.memory_space<vmem>>, vector<8x48xbf16>
    %10 = arith.truncf %8 : vector<48x256xf32> to vector<48x256xbf16>
    %cst_9 = arith.constant dense<0.000000e+00> : vector<8x256xf32>
    %11 = tpu.matmul %9, %10, %cst_9 {dimension_numbers = #tpu.dot_dimension_numbers<[1], [0], [0], [1], [0, 0, 1, 1], [], []>} : vector<8x48xbf16>, vector<48x256xbf16>, vector<8x256xf32> -> vector<8x256xf32>
    %c0_10 = arith.constant 0 : index
    %c0_11 = arith.constant 0 : index
    %12 = vector.load %arg6[%c0_10, %c0_11] : memref<8x1xf32, #tpu.memory_space<vmem>>, vector<8x1xf32>
    %13 = vector.broadcast %12 : vector<8x1xf32> to vector<8x256xf32>
    %14 = arith.addf %11, %13 : vector<8x256xf32>
    %cst_12 = arith.constant 0.000000e+00 : f32
    %15 = vector.broadcast %cst_12 : f32 to vector<8x256xf32>
    %16 = arith.maximumf %14, %15 : vector<8x256xf32>
    %c0_13 = arith.constant 0 : index
    %c0_14 = arith.constant 0 : index
    %c0_15 = arith.constant 0 : index
    %17 = vector.load %arg7[%c0_13, %c0_14, %c0_15] : memref<1x8x256xf32, #tpu.memory_space<vmem>>, vector<1x8x256xf32>
    %18 = vector.shape_cast %17 : vector<1x8x256xf32> to vector<8x256xf32>
    %19 = vector.shape_cast %16 : vector<8x256xf32> to vector<1x8x256xf32>
    tpu.vector_store %arg7[%c0_13, %c0_14, %c0_15], %19 {strides = array<i32>} : memref<1x8x256xf32, #tpu.memory_space<vmem>>, vector<1x8x256xf32>,
    return
  }
  func.func @transform_0(%arg0: i32, %arg1: i32) -> (i32, i32, i32) {
    %c0_i32 = arith.constant 0 : i32
    %c0_i32_0 = arith.constant 0 : i32
    return %arg0, %c0_i32, %arg1 : i32, i32, i32
  }
  func.func @transform_1(%arg0: i32, %arg1: i32) -> (i32, i32) {
    %c0_i32 = arith.constant 0 : i32
    %c0_i32_0 = arith.constant 0 : i32
    %c0_i32_1 = arith.constant 0 : i32
    return %c0_i32, %c0_i32_0 : i32, i32
  }
  func.func @transform_2(%arg0: i32, %arg1: i32) -> (i32, i32) {
    %c0_i32 = arith.constant 0 : i32
    %c0_i32_0 = arith.constant 0 : i32
    %c0_i32_1 = arith.constant 0 : i32
    return %c0_i32, %c0_i32_0 : i32, i32
  }
  func.func @transform_3(%arg0: i32, %arg1: i32) -> (i32, i32) {
    %c0_i32 = arith.constant 0 : i32
    %c0_i32_0 = arith.constant 0 : i32
    %c0_i32_1 = arith.constant 0 : i32
    return %c0_i32, %c0_i32_0 : i32, i32
  }
  func.func @transform_4(%arg0: i32, %arg1: i32) -> (i32, i32) {
    %c0_i32 = arith.constant 0 : i32
    %c0_i32_0 = arith.constant 0 : i32
    %c0_i32_1 = arith.constant 0 : i32
    return %c0_i32, %c0_i32_0 : i32, i32
  }
  func.func @transform_5(%arg0: i32, %arg1: i32) -> (i32, i32, i32) {
    %c0_i32 = arith.constant 0 : i32
    %c0_i32_0 = arith.constant 0 : i32
    return %arg0, %c0_i32, %arg1 : i32, i32, i32
  }
}

</mosaic_0001>

<llo_original>
// kernel: squeeze.9
$region0: #{squeeze.9}
  %s0 = inlined_call_operand.vmem [shape: f32[1,3,3,4,8], index: 0, kind: input, shape index: {}]
  %s1 = inlined_call_operand.vmem [shape: f32[36,8], index: 1, kind: output, shape index: {}]
  $region1: #{squeeze.9} parent=0
    #allocation0 [shape = 'u8[36864]{0}', space=vmem, size = 0x9000, scoped, tag = 'scoped mem for input reshape']
    %s3 = ssub.s32 16, 1
    %s4 = scalar_lea.vmem %s0, 32
    %v5 = vld [vmem:[%s4] sm:%s3]
    %s6 = scalar_lea.vmem [#allocation0], 64
    %7 = vst [vmem:[%s6] sm:%s3] %v5
    %s8 = scalar_lea.vmem %s0, 28
    %v9 = vld [vmem:[%s8] sm:%s3]
    %s10 = scalar_lea.vmem [#allocation0], 56
    %11 = vst [vmem:[%s10] sm:%s3] %v9
    %s12 = scalar_lea.vmem %s0, 24
    %v13 = vld [vmem:[%s12] sm:%s3]
    %s14 = scalar_lea.vmem [#allocation0], 48
    %15 = vst [vmem:[%s14] sm:%s3] %v13
    %s16 = scalar_lea.vmem %s0, 20
    %v17 = vld [vmem:[%s16] sm:%s3]
    %s18 = scalar_lea.vmem [#allocation0], 40
    %19 = vst [vmem:[%s18] sm:%s3] %v17
    %s20 = scalar_lea.vmem %s0, 16
    %v21 = vld [vmem:[%s20] sm:%s3]
    %s22 = scalar_lea.vmem [#allocation0], 32
    %23 = vst [vmem:[%s22] sm:%s3] %v21
    %s24 = scalar_lea.vmem %s0, 12
    %v25 = vld [vmem:[%s24] sm:%s3]
    %s26 = scalar_lea.vmem [#allocation0], 24
    %27 = vst [vmem:[%s26] sm:%s3] %v25
    %s28 = scalar_lea.vmem %s0, 8
    %v29 = vld [vmem:[%s28] sm:%s3]
    %s30 = scalar_lea.vmem [#allocation0], 16
    %31 = vst [vmem:[%s30] sm:%s3] %v29
    %s32 = scalar_lea.vmem %s0, 4
    %v33 = vld [vmem:[%s32] sm:%s3]
    %s34 = scalar_lea.vmem [#allocation0], 8
    %35 = vst [vmem:[%s34] sm:%s3] %v33
    %v36 = vld [vmem:[%s0] sm:%s3]
    %37 = vst [vmem:[#allocation0] sm:%s3] %v36
    %v38 = vld [vmem:[#allocation0] sm:$0xf]
    %vm39 = vcmask 64512
    %40 = vst.msk [vmem:[%s1] sm:$0xf] %vm39, %v38
    %s41 = scalar_lea.vmem [#allocation0], 8
    %v42 = vld [vmem:[%s41] sm:$0xf]
    %vm43 = vcmask 64512
    %s44 = scalar_lea.vmem %s1, 4
    %45 = vst.msk [vmem:[%s44] sm:$0xf] %vm43, %v42
    %s46 = scalar_lea.vmem [#allocation0], 16
    %v47 = vld [vmem:[%s46] sm:$0xf]
    %vm48 = vcmask 64512
    %s49 = scalar_lea.vmem %s1, 8
    %50 = vst.msk [vmem:[%s49] sm:$0xf] %vm48, %v47
    %s51 = scalar_lea.vmem [#allocation0], 24
    %v52 = vld [vmem:[%s51] sm:$0xf]
    %vm53 = vcmask 64512
    %s54 = scalar_lea.vmem %s1, 12
    %55 = vst.msk [vmem:[%s54] sm:$0xf] %vm53, %v52
    %s56 = scalar_lea.vmem [#allocation0], 32
    %v57 = vld [vmem:[%s56] sm:$0xf]
    %vm58 = vcmask 64512
    %s59 = scalar_lea.vmem %s1, 16
    %60 = vst.msk [vmem:[%s59] sm:$0xf] %vm58, %v57
    %s61 = scalar_lea.vmem [#allocation0], 40
    %v62 = vld [vmem:[%s61] sm:$0xf]
    %vm63 = vcmask 64512
    %s64 = scalar_lea.vmem %s1, 20
    %65 = vst.msk [vmem:[%s64] sm:$0xf] %vm63, %v62
    %s66 = scalar_lea.vmem [#allocation0], 48
    %v67 = vld [vmem:[%s66] sm:$0xf]
    %vm68 = vcmask 64512
    %s69 = scalar_lea.vmem %s1, 24
    %70 = vst.msk [vmem:[%s69] sm:$0xf] %vm68, %v67
    %s71 = scalar_lea.vmem [#allocation0], 56
    %v72 = vld [vmem:[%s71] sm:$0xf]
    %vm73 = vcmask 64512
    %s74 = scalar_lea.vmem %s1, 28
    %75 = vst.msk [vmem:[%s74] sm:$0xf] %vm73, %v72
    %s76 = scalar_lea.vmem [#allocation0], 64
    %v77 = vld [vmem:[%s76] sm:$0xf]
    %vm78 = vcmask 64512
    %s79 = scalar_lea.vmem %s1, 32
    %80 = vst.msk [vmem:[%s79] sm:$0xf] %vm78, %v77

// kernel: _lambda_.1
$region0: #{_lambda_.1}
  #allocation0 [shape = 'u32[]', space=smem, size = 0x4, offset = 0x4, fixed_abs, tag = 'smem constant byte address 0x4 - core index']
  #allocation1 [shape = 'u32[72,128]{1,0:T(1,128)}', space=vmem, size = 0x9000, scoped, tag = 'internal scratch']
  %s0 = inlined_call_operand.vmem [shape: bf16[2,192,256], index: 0, kind: input, shape index: {}]
  %s1 = inlined_call_operand.vmem [shape: bf16[48,192], index: 1, kind: input, shape index: {}]
  %s2 = inlined_call_operand.vmem [shape: f32[48,1], index: 2, kind: input, shape index: {}]
  %s3 = inlined_call_operand.vmem [shape: bf16[8,48], index: 3, kind: input, shape index: {}]
  %s4 = inlined_call_operand.vmem [shape: f32[8,1], index: 4, kind: input, shape index: {}]
  %s5 = inlined_call_operand.vmem [shape: f32[2,8,256], index: 5, kind: output, shape index: {}]
  %s6 = sld [smem:[#allocation0]]
  $region53: #{_lambda_.1} parent=0
    _
  %s8 = ssub.s32 1, %s6
  %s9 = scalar_select 0, %s8, %s6
  loop: start=0, step=1, limit=4
  $region2: #{_lambda_.1} parent=0 // loop_pre_header
    _
  $region3: #{_lambda_.1} parent=0 // loop_header
    %s11 = sphi 0, %s15
    %p12 = scmp.ge.s32.totalorder %s11, 4
    %s18 = sphi 0, %s30
    %s19 = sphi 0, %s26
    %s20 = sphi 0, %s18
    %s21 = sphi 0, %s19
    %s22 = sphi 0, %s20
    %s23 = sphi 0, %s21
    %s35 = sphi 0, %s37
    %s38 = sphi 0, %s35
    %s39 = sphi 0, %s38
    %s55 = sphi 0, %s39
    %s59 = sphi 0, %s59
    %s61 = sphi 0, %s59
    %s62 = sphi 0, %s61
    %s76 = sphi 0, %s62
    %s80 = sphi 0, %s80
    %s82 = sphi 0, %s80
    %s83 = sphi 0, %s82
    %s97 = sphi 0, %s83
    %s101 = sphi 0, %s101
    %s103 = sphi 0, %s101
    %s104 = sphi 0, %s103
    %s118 = sphi 0, %s104
    %s122 = sphi 0, %s122
    %s124 = sphi 0, %s122
    %s125 = sphi 0, %s124
    %s139 = sphi 0, %s125
    %s147 = sphi 0, %s149
    %s150 = sphi 0, %s147
    %s151 = sphi 0, %s150
    %s167 = sphi 0, %s151
  $region4: #{_lambda_.1} parent=0 // loop_header_branch
    %14 = sbr.rel (%p12) target = $region8
  $region5: #{_lambda_.1} parent=0 // loop_body
    %s16 = ssub.s32 %s11, 1
    %s17 = ssub.s32 %s11, 2
    %s24 = sadd.s32 1, %s19
    %p25 = scmp.ge.s32.totalorder %s24, 1
    %s26 = scalar_select %p25, 0, %s24
    %s27 = sadd.s32 1, %s18
    %s28 = scalar_select %p25, %s27, %s18
    %p29 = scmp.ge.s32.totalorder %s28, 2
    %s30 = scalar_select %p29, 0, %s28
    %s31 = ssub.s32 %s18, %s30
    %s32 = ssub.s32 %s19, %s26
    %s33 = sor.u32 %s31, %s32
    %p34 = scmp.eq.s32.totalorder %s33, 0
    %s36 = sadd.s32 %s35, 1
    %s37 = scalar_select %p34, %s35, %s36
    %p40 = pneg %p34
    %p41 = scmp.eq.s32.totalorder %s11, 1
    %p42 = por %p40, %p41
    %p43 = scmp.ne.s32.totalorder %s35, %s38
    %p44 = scmp.eq.s32.totalorder %s11, 0
    %p45 = por %p43, %p44
    %p46 = scmp.ne.s32.totalorder %s35, %s38
    %p47 = scmp.eq.s32.totalorder %s16, 1
    %p48 = por %p46, %p47
    %p49 = scmp.ne.s32.totalorder %s38, %s39
    %p50 = scmp.eq.s32.totalorder %s16, 0
    %p51 = por %p49, %p50
    %p52 = scmp.ne.s32.totalorder %s38, %s39
    %p53 = scmp.eq.s32.totalorder %s17, 1
    %p54 = por %p52, %p53
    %p56 = scmp.ne.s32.totalorder %s39, %s55
    %p57 = scmp.eq.s32.totalorder %s17, 0
    %p58 = por %p56, %p57
    %s60 = sadd.s32 %s59, 1
    %p63 = scmp.eq.s32.totalorder %s11, 1
    %p64 = scmp.ne.s32.totalorder %s59, %s61
    %p65 = scmp.eq.s32.totalorder %s11, 0
    %p66 = por %p64, %p65
    %p67 = scmp.ne.s32.totalorder %s59, %s61
    %p68 = scmp.eq.s32.totalorder %s16, 1
    %p69 = por %p67, %p68
    %p70 = scmp.ne.s32.totalorder %s61, %s62
    %p71 = scmp.eq.s32.totalorder %s16, 0
    %p72 = por %p70, %p71
    %p73 = scmp.ne.s32.totalorder %s61, %s62
    %p74 = scmp.eq.s32.totalorder %s17, 1
    %p75 = por %p73, %p74
    %p77 = scmp.ne.s32.totalorder %s62, %s76
    %p78 = scmp.eq.s32.totalorder %s17, 0
    %p79 = por %p77, %p78
    %s81 = sadd.s32 %s80, 1
    %p84 = scmp.eq.s32.totalorder %s11, 1
    %p85 = scmp.ne.s32.totalorder %s80, %s82
    %p86 = scmp.eq.s32.totalorder %s11, 0
    %p87 = por %p85, %p86
    %p88 = scmp.ne.s32.totalorder %s80, %s82
    %p89 = scmp.eq.s32.totalorder %s16, 1
    %p90 = por %p88, %p89
    %p91 = scmp.ne.s32.totalorder %s82, %s83
    %p92 = scmp.eq.s32.totalorder %s16, 0
    %p93 = por %p91, %p92
    %p94 = scmp.ne.s32.totalorder %s82, %s83
    %p95 = scmp.eq.s32.totalorder %s17, 1
    %p96 = por %p94, %p95
    %p98 = scmp.ne.s32.totalorder %s83, %s97
    %p99 = scmp.eq.s32.totalorder %s17, 0
    %p100 = por %p98, %p99
    %s102 = sadd.s32 %s101, 1
    %p105 = scmp.eq.s32.totalorder %s11, 1
    %p106 = scmp.ne.s32.totalorder %s101, %s103
    %p107 = scmp.eq.s32.totalorder %s11, 0
    %p108 = por %p106, %p107
    %p109 = scmp.ne.s32.totalorder %s101, %s103
    %p110 = scmp.eq.s32.totalorder %s16, 1
    %p111 = por %p109, %p110
    %p112 = scmp.ne.s32.totalorder %s103, %s104
    %p113 = scmp.eq.s32.totalorder %s16, 0
    %p114 = por %p112, %p113
    %p115 = scmp.ne.s32.totalorder %s103, %s104
    %p116 = scmp.eq.s32.totalorder %s17, 1
    %p117 = por %p115, %p116
    %p119 = scmp.ne.s32.totalorder %s104, %s118
    %p120 = scmp.eq.s32.totalorder %s17, 0
    %p121 = por %p119, %p120
    %s123 = sadd.s32 %s122, 1
    %p126 = scmp.eq.s32.totalorder %s11, 1
    %p127 = scmp.ne.s32.totalorder %s122, %s124
    %p128 = scmp.eq.s32.totalorder %s11, 0
    %p129 = por %p127, %p128
    %p130 = scmp.ne.s32.totalorder %s122, %s124
    %p131 = scmp.eq.s32.totalorder %s16, 1
    %p132 = por %p130, %p131
    %p133 = scmp.ne.s32.totalorder %s124, %s125
    %p134 = scmp.eq.s32.totalorder %s16, 0
    %p135 = por %p133, %p134
    %p136 = scmp.ne.s32.totalorder %s124, %s125
    %p137 = scmp.eq.s32.totalorder %s17, 1
    %p138 = por %p136, %p137
    %p140 = scmp.ne.s32.totalorder %s125, %s139
    %p141 = scmp.eq.s32.totalorder %s17, 0
    %p142 = por %p140, %p141
    %s143 = ssub.s32 %s18, %s30
    %s144 = ssub.s32 %s19, %s26
    %s145 = sor.u32 %s143, %s144
    %p146 = scmp.eq.s32.totalorder %s145, 0
    %s148 = sadd.s32 %s147, 1
    %s149 = scalar_select %p146, %s147, %s148
    %p152 = pneg %p146
    %p153 = scmp.eq.s32.totalorder %s11, 1
    %p154 = por %p152, %p153
    %p155 = scmp.ne.s32.totalorder %s147, %s150
    %p156 = scmp.eq.s32.totalorder %s11, 0
    %p157 = por %p155, %p156
    %p158 = scmp.ne.s32.totalorder %s147, %s150
    %p159 = scmp.eq.s32.totalorder %s16, 1
    %p160 = por %p158, %p159
    %p161 = scmp.ne.s32.totalorder %s150, %s151
    %p162 = scmp.eq.s32.totalorder %s16, 0
    %p163 = por %p161, %p162
    %p164 = scmp.ne.s32.totalorder %s150, %s151
    %p165 = scmp.eq.s32.totalorder %s17, 1
    %p166 = por %p164, %p165
    %p168 = scmp.ne.s32.totalorder %s151, %s167
    %p169 = scmp.eq.s32.totalorder %s17, 0
    %p170 = por %p168, %p169
    %p171 = scmp.le.s32.totalorder 1, %s11
    %p172 = scmp.lt.s32.totalorder %s11, 3
    %p173 = pnand %p171, %p172
    %p174 = pneg %p173
    // Predicated region
    $region9: #{_lambda_.1} parent=5 // pred_check
      _
    $region10: #{_lambda_.1} parent=5 // pred_check_branch
      %176 = sbr.rel (%p173) target = $region12
    $region11: #{_lambda_.1} parent=5 // pred_region
      %s177 = ssub.s32 %s11, 1
      // Predicated region
      $region13: #{_lambda_.1} parent=11 // pred_check
        %p178 = pneg %p72
      $region14: #{_lambda_.1} parent=11 // pred_check_branch
        %180 = sbr.rel (%p178) target = $region16
      $region15: #{_lambda_.1} parent=11 // pred_region
        _
      $region16: #{_lambda_.1} parent=11 // pred_fallthru
        _
      // Predicated region
      $region17: #{_lambda_.1} parent=11 // pred_check
        %p181 = pneg %p93
      $region18: #{_lambda_.1} parent=11 // pred_check_branch
        %183 = sbr.rel (%p181) target = $region20
      $region19: #{_lambda_.1} parent=11 // pred_region
        _
      $region20: #{_lambda_.1} parent=11 // pred_fallthru
        _
      // Predicated region
      $region21: #{_lambda_.1} parent=11 // pred_check
        %p184 = pneg %p114
      $region22: #{_lambda_.1} parent=11 // pred_check_branch
        %186 = sbr.rel (%p184) target = $region24
      $region23: #{_lambda_.1} parent=11 // pred_region
        _
      $region24: #{_lambda_.1} parent=11 // pred_fallthru
        _
      // Predicated region
      $region25: #{_lambda_.1} parent=11 // pred_check
        %p187 = pneg %p135
      $region26: #{_lambda_.1} parent=11 // pred_check_branch
        %189 = sbr.rel (%p187) target = $region28
      $region27: #{_lambda_.1} parent=11 // pred_region
        _
      $region28: #{_lambda_.1} parent=11 // pred_fallthru
        _
    $region12: #{_lambda_.1} parent=5 // pred_fallthru
      _
    %p190 = scmp.lt.s32.totalorder %s11, 2
    // Predicated region
    $region29: #{_lambda_.1} parent=5 // pred_check
      %p191 = pneg %p190
    $region30: #{_lambda_.1} parent=5 // pred_check_branch
      %193 = sbr.rel (%p191) target = $region32
    $region31: #{_lambda_.1} parent=5 // pred_region
      // Predicated region
      $region33: #{_lambda_.1} parent=31 // pred_check
        %p194 = pneg %p45
      $region34: #{_lambda_.1} parent=31 // pred_check_branch
        %196 = sbr.rel (%p194) target = $region36
      $region35: #{_lambda_.1} parent=31 // pred_region
        %s197 = smul.u32 2, %s19
        %p198 = scmp.lt.s32.totalorder %s18, 1
        %s199 = scalar_select %p198, %s18, 1
        %p200 = scmp.lt.s32.totalorder %s197, 1
        %s201 = scalar_select %p200, %s197, 1
        %s202 = smul.addr %s199, 48
        %s203 = sadd.s32 %s201, %s202
        %s204 = smul.addr %s203, 4
        %s205 = scalar_lea.vmem %s0, %s204
        %s206 = smul.u32 2, %s19
      $region36: #{_lambda_.1} parent=31 // pred_fallthru
        _
    $region32: #{_lambda_.1} parent=5 // pred_fallthru
      _
    %p207 = scmp.le.s32.totalorder 1, %s11
    %p208 = scmp.lt.s32.totalorder %s11, 3
    %p209 = pnand %p207, %p208
    %p210 = pneg %p209
    // Predicated region
    $region37: #{_lambda_.1} parent=5 // pred_check
      _
    $region38: #{_lambda_.1} parent=5 // pred_check_branch
      %212 = sbr.rel (%p209) target = $region40
    $region39: #{_lambda_.1} parent=5 // pred_region
      %s213 = ssub.s32 %s11, 1
      %s214 = smul.u32 2, %s21
      %p215 = scmp.lt.s32.totalorder %s20, 1
      %s216 = scalar_select %p215, %s20, 1
      %p217 = scmp.lt.s32.totalorder %s214, 1
      %s218 = scalar_select %p217, %s214, 1
      %s219 = smul.addr %s216, 48
      %s220 = sadd.s32 %s218, %s219
      %s221 = smul.addr %s220, 4
      %s222 = scalar_lea.vmem %s0, %s221
      %p223 = pneg %p51
      %p224 = pneg %p48
      %p225 = pneg %p72
      %p226 = pneg %p69
      %p227 = pneg %p93
      %p228 = pneg %p90
      %p229 = pneg %p114
      %p230 = pneg %p111
      %p231 = pneg %p135
      %p232 = pneg %p132
      %p233 = pneg %p163
      %p234 = pneg %p160
      %s235 = smul.u32 2, %s21
      %p236 = scmp.lt.s32.totalorder %s20, 1
      %s237 = scalar_select %p236, %s20, 1
      %p238 = scmp.lt.s32.totalorder %s235, 1
      %s239 = scalar_select %p238, %s235, 1
      %s240 = smul.addr %s237, 2
      %s241 = sadd.s32 %s239, %s240
      %s242 = smul.addr %s241, 8
      %s243 = scalar_lea.vmem %s5, %s242
      %s244 = smul.u32 2, %s21
      %p245 = scmp.lt.s32.totalorder %s20, 1
      %s246 = scalar_select %p245, %s20, 1
      %p247 = scmp.lt.s32.totalorder %s244, 1
      %s248 = scalar_select %p247, %s244, 1
      %s249 = smul.addr %s246, 48
      %s250 = sadd.s32 %s248, %s249
      %s251 = smul.addr %s250, 4
      %s252 = scalar_lea.vmem %s0, %s251
      %s253 = smul.u32 2, %s21
      %s254 = smul.u32 2, %s21
      %p255 = scmp.lt.s32.totalorder %s20, 1
      %s256 = scalar_select %p255, %s20, 1
      %p257 = scmp.lt.s32.totalorder %s254, 1
      %s258 = scalar_select %p257, %s254, 1
      %s259 = smul.addr %s256, 2
      %s260 = sadd.s32 %s258, %s259
      %s261 = smul.addr %s260, 8
      %s262 = scalar_lea.vmem %s5, %s261
      %s263 = smul.u32 2, %s21
      %v265 = vld [vmem:[%s1] sm:$0xff]
      %v266 = vld [vmem:[%s1 + $0x8] sm:$0xff]
      %v267 = vld [vmem:[%s1 + $0x10] sm:$0xff]
      %v268 = vld [vmem:[%s1 + $0x18] sm:$0xff]
      %v269 = vld [vmem:[%s1 + $0x20] sm:$0xff]
      %v270 = vld [vmem:[%s1 + $0x28] sm:$0xff]
      %v271 = vld [vmem:[%s252] sm:$0xff]
      %v272 = vld [vmem:[%s252 + $0x8] sm:$0xff]
      %v273 = vld [vmem:[%s252 + $0x10] sm:$0xff]
      %v274 = vld [vmem:[%s252 + $0x18] sm:$0xff]
      %v275 = vld [vmem:[%s252 + $0x20] sm:$0xff]
      %v276 = vld [vmem:[%s252 + $0x28] sm:$0xff]
      %v277 = vld [vmem:[%s252 + $0x30] sm:$0xff]
      %v278 = vld [vmem:[%s252 + $0x38] sm:$0xff]
      %v279 = vld [vmem:[%s252 + $0x40] sm:$0xff]
      %v280 = vld [vmem:[%s252 + $0x48] sm:$0xff]
      %v281 = vld [vmem:[%s252 + $0x50] sm:$0xff]
      %v282 = vld [vmem:[%s252 + $0x58] sm:$0xff]
      %v283 = vld [vmem:[%s252 + $0x60] sm:$0xff]
      %v284 = vld [vmem:[%s252 + $0x68] sm:$0xff]
      %v285 = vld [vmem:[%s252 + $0x70] sm:$0xff]
      %v286 = vld [vmem:[%s252 + $0x78] sm:$0xff]
      %v287 = vld [vmem:[%s252 + $0x80] sm:$0xff]
      %v288 = vld [vmem:[%s252 + $0x88] sm:$0xff]
      %v289 = vld [vmem:[%s252 + $0x90] sm:$0xff]
      %v290 = vld [vmem:[%s252 + $0x98] sm:$0xff]
      %v291 = vld [vmem:[%s252 + $0xa0] sm:$0xff]
      %v292 = vld [vmem:[%s252 + $0xa8] sm:$0xff]
      %v293 = vld [vmem:[%s252 + $0xb0] sm:$0xff]
      %v294 = vld [vmem:[%s252 + $0xb8] sm:$0xff]
      %v295 = vld [vmem:[%s2] sm:$0xff]
      %v296 = vld [vmem:[%s2 + $0x8] sm:$0xff]
      %v297 = vld [vmem:[%s2 + $0x10] sm:$0xff]
      %v298 = vld [vmem:[%s2 + $0x18] sm:$0xff]
      %v299 = vld [vmem:[%s2 + $0x20] sm:$0xff]
      %v300 = vld [vmem:[%s2 + $0x28] sm:$0xff]
      %302 = vset.pattern.permute.xlu0 0
      %303 = vperm.xlu0 %302, %v295
      %v304 = vpop.permute.xlu0 %303
      %307 = vset.pattern.permute.xlu0 0
      %308 = vperm.xlu0 %307, %v296
      %v309 = vpop.permute.xlu0 %308
      %312 = vset.pattern.permute.xlu0 0
      %313 = vperm.xlu0 %312, %v297
      %v314 = vpop.permute.xlu0 %313
      %317 = vset.pattern.permute.xlu0 0
      %318 = vperm.xlu0 %317, %v298
      %v319 = vpop.permute.xlu0 %318
      %322 = vset.pattern.permute.xlu0 0
      %323 = vperm.xlu0 %322, %v299
      %v324 = vpop.permute.xlu0 %323
      %327 = vset.pattern.permute.xlu0 0
      %328 = vperm.xlu0 %327, %v300
      %v329 = vpop.permute.xlu0 %328
      %v337 = vunpack.c.l.b16 %v265
      %v338 = vunpack.c.h.b16 %v265
      %v339 = vunpack.c.l.b16 %v266
      %v340 = vunpack.c.h.b16 %v266
      %v341 = vunpack.c.l.b16 %v267
      %v342 = vunpack.c.h.b16 %v267
      %v343 = vunpack.c.l.b16 %v268
      %v344 = vunpack.c.h.b16 %v268
      %v345 = vunpack.c.l.b16 %v269
      %v346 = vunpack.c.h.b16 %v269
      %v347 = vunpack.c.l.b16 %v270
      %v348 = vunpack.c.h.b16 %v270
      %v349 = vpack.c.b16 %v339, %v337
      %v350 = vpack.c.b16 %v340, %v338
      %v351 = vpack.c.b16 %v343, %v341
      %v352 = vpack.c.b16 %v344, %v342
      %v353 = vpack.c.b16 %v347, %v345
      %v354 = vpack.c.b16 %v348, %v346
      %v382 = vunpack.c.l.b16 %v271
      %v383 = vunpack.c.h.b16 %v271
      %v384 = vunpack.c.l.b16 %v272
      %v385 = vunpack.c.h.b16 %v272
      %v386 = vunpack.c.l.b16 %v273
      %v387 = vunpack.c.h.b16 %v273
      %v388 = vunpack.c.l.b16 %v274
      %v389 = vunpack.c.h.b16 %v274
      %v390 = vunpack.c.l.b16 %v275
      %v391 = vunpack.c.h.b16 %v275
      %v392 = vunpack.c.l.b16 %v276
      %v393 = vunpack.c.h.b16 %v276
      %v394 = vunpack.c.l.b16 %v277
      %v395 = vunpack.c.h.b16 %v277
      %v396 = vunpack.c.l.b16 %v278
      %v397 = vunpack.c.h.b16 %v278
      %v398 = vunpack.c.l.b16 %v279
      %v399 = vunpack.c.h.b16 %v279
      %v400 = vunpack.c.l.b16 %v280
      %v401 = vunpack.c.h.b16 %v280
      %v402 = vunpack.c.l.b16 %v281
      %v403 = vunpack.c.h.b16 %v281
      %v404 = vunpack.c.l.b16 %v282
      %v405 = vunpack.c.h.b16 %v282
      %v406 = vunpack.c.l.b16 %v283
      %v407 = vunpack.c.h.b16 %v283
      %v408 = vunpack.c.l.b16 %v284
      %v409 = vunpack.c.h.b16 %v284
      %v410 = vunpack.c.l.b16 %v285
      %v411 = vunpack.c.h.b16 %v285
      %v412 = vunpack.c.l.b16 %v286
      %v413 = vunpack.c.h.b16 %v286
      %v414 = vunpack.c.l.b16 %v287
      %v415 = vunpack.c.h.b16 %v287
      %v416 = vunpack.c.l.b16 %v288
      %v417 = vunpack.c.h.b16 %v288
      %v418 = vunpack.c.l.b16 %v289
      %v419 = vunpack.c.h.b16 %v289
      %v420 = vunpack.c.l.b16 %v290
      %v421 = vunpack.c.h.b16 %v290
      %v422 = vunpack.c.l.b16 %v291
      %v423 = vunpack.c.h.b16 %v291
      %v424 = vunpack.c.l.b16 %v292
      %v425 = vunpack.c.h.b16 %v292
      %v426 = vunpack.c.l.b16 %v293
      %v427 = vunpack.c.h.b16 %v293
      %v428 = vunpack.c.l.b16 %v294
      %v429 = vunpack.c.h.b16 %v294
      %v430 = vpack.c.b16 %v384, %v382
      %v431 = vpack.c.b16 %v385, %v383
      %v432 = vpack.c.b16 %v388, %v386
      %v433 = vpack.c.b16 %v389, %v387
      %v434 = vpack.c.b16 %v392, %v390
      %v435 = vpack.c.b16 %v393, %v391
      %v436 = vpack.c.b16 %v396, %v394
      %v437 = vpack.c.b16 %v397, %v395
      %v438 = vpack.c.b16 %v400, %v398
      %v439 = vpack.c.b16 %v401, %v399
      %v440 = vpack.c.b16 %v404, %v402
      %v441 = vpack.c.b16 %v405, %v403
      %v442 = vpack.c.b16 %v408, %v406
      %v443 = vpack.c.b16 %v409, %v407
      %v444 = vpack.c.b16 %v412, %v410
      %v445 = vpack.c.b16 %v413, %v411
      %v446 = vpack.c.b16 %v416, %v414
      %v447 = vpack.c.b16 %v417, %v415
      %v448 = vpack.c.b16 %v420, %v418
      %v449 = vpack.c.b16 %v421, %v419
      %v450 = vpack.c.b16 %v424, %v422
      %v451 = vpack.c.b16 %v425, %v423
      %v452 = vpack.c.b16 %v428, %v426
      %v453 = vpack.c.b16 %v429, %v427
      %vm478 = vcmask 523264
      %v480 = vsel %vm478, %v350, 0
      %v483 = vsel %vm478, %v352, 0
      %v486 = vsel %vm478, %v354, 0
      %488 = vmatpush.bf16.msra.mxu0 %v444
      %489 = vmatpush.bf16.msra.mxu0 %v442
      %490 = vmatpush.bf16.msra.mxu0 %v440
      %491 = vmatpush.bf16.msra.mxu0 %v438
      %492 = vmatpush.bf16.msra.mxu0 %v436
      %493 = vmatpush.bf16.msra.mxu0 %v434
      %494 = vmatpush.bf16.msra.mxu0 %v432
      %495 = vmatpush.bf16.msra.mxu0 %v430
      %496 = vmatmul.bf16.gmra.mxu0 %v349
      %v497 = vpop.f32.mrf.mxu0
      %v498 = vadd.f32 %v304, %v497
      %v499 = vpop.f32.mrf.mxu0
      %v500 = vadd.f32 %v309, %v499
      %501 = vmatmul.bf16.gmra.mxu0 %v351
      %v502 = vpop.f32.mrf.mxu0
      %v503 = vadd.f32 %v314, %v502
      %v504 = vpop.f32.mrf.mxu0
      %v505 = vadd.f32 %v319, %v504
      %506 = vmatmul.bf16.gmra.mxu0 %v353
      %v507 = vpop.f32.mrf.mxu0
      %v508 = vadd.f32 %v324, %v507
      %v509 = vpop.f32.mrf.mxu0
      %v510 = vadd.f32 %v329, %v509
      %511 = vdwg.mxu0
      %512 = vmatpush.bf16.msra.mxu0 0
      %513 = vmatpush.bf16.msra.mxu0 0
      %514 = vmatpush.bf16.msra.mxu0 0
      %515 = vmatpush.bf16.msra.mxu0 0
      %516 = vmatpush.bf16.msra.mxu0 %v452
      %517 = vmatpush.bf16.msra.mxu0 %v450
      %518 = vmatpush.bf16.msra.mxu0 %v448
      %519 = vmatpush.bf16.msra.mxu0 %v446
      %520 = vmatmul.bf16.gmra.mxu0 %v480
      %v521 = vpop.f32.mrf.mxu0
      %v522 = vadd.f32 %v498, %v521
      %v523 = vpop.f32.mrf.mxu0
      %v524 = vadd.f32 %v500, %v523
      %525 = vmatmul.bf16.gmra.mxu0 %v483
      %v526 = vpop.f32.mrf.mxu0
      %v527 = vadd.f32 %v503, %v526
      %v528 = vpop.f32.mrf.mxu0
      %v529 = vadd.f32 %v505, %v528
      %530 = vmatmul.bf16.gmra.mxu0 %v486
      %v531 = vpop.f32.mrf.mxu0
      %v532 = vadd.f32 %v508, %v531
      %v533 = vpop.f32.mrf.mxu0
      %v534 = vadd.f32 %v510, %v533
      %535 = vdwg.mxu0
      %536 = vmatpush.bf16.msra.mxu0 %v445
      %537 = vmatpush.bf16.msra.mxu0 %v443
      %538 = vmatpush.bf16.msra.mxu0 %v441
      %539 = vmatpush.bf16.msra.mxu0 %v439
      %540 = vmatpush.bf16.msra.mxu0 %v437
      %541 = vmatpush.bf16.msra.mxu0 %v435
      %542 = vmatpush.bf16.msra.mxu0 %v433
      %543 = vmatpush.bf16.msra.mxu0 %v431
      %544 = vmatmul.bf16.gmra.mxu0 %v349
      %v545 = vpop.f32.mrf.mxu0
      %v546 = vadd.f32 %v304, %v545
      %v547 = vpop.f32.mrf.mxu0
      %v548 = vadd.f32 %v309, %v547
      %549 = vmatmul.bf16.gmra.mxu0 %v351
      %v550 = vpop.f32.mrf.mxu0
      %v551 = vadd.f32 %v314, %v550
      %v552 = vpop.f32.mrf.mxu0
      %v553 = vadd.f32 %v319, %v552
      %554 = vmatmul.bf16.gmra.mxu0 %v353
      %v555 = vpop.f32.mrf.mxu0
      %v556 = vadd.f32 %v324, %v555
      %v557 = vpop.f32.mrf.mxu0
      %v558 = vadd.f32 %v329, %v557
      %559 = vdwg.mxu0
      %560 = vmatpush.bf16.msra.mxu0 0
      %561 = vmatpush.bf16.msra.mxu0 0
      %562 = vmatpush.bf16.msra.mxu0 0
      %563 = vmatpush.bf16.msra.mxu0 0
      %564 = vmatpush.bf16.msra.mxu0 %v453
      %565 = vmatpush.bf16.msra.mxu0 %v451
      %566 = vmatpush.bf16.msra.mxu0 %v449
      %567 = vmatpush.bf16.msra.mxu0 %v447
      %568 = vmatmul.bf16.gmra.mxu0 %v480
      %v569 = vpop.f32.mrf.mxu0
      %v570 = vadd.f32 %v546, %v569
      %v571 = vpop.f32.mrf.mxu0
      %v572 = vadd.f32 %v548, %v571
      %573 = vmatmul.bf16.gmra.mxu0 %v483
      %v574 = vpop.f32.mrf.mxu0
      %v575 = vadd.f32 %v551, %v574
      %v576 = vpop.f32.mrf.mxu0
      %v577 = vadd.f32 %v553, %v576
      %578 = vmatmul.bf16.gmra.mxu0 %v486
      %v579 = vpop.f32.mrf.mxu0
      %v580 = vadd.f32 %v556, %v579
      %v581 = vpop.f32.mrf.mxu0
      %v582 = vadd.f32 %v558, %v581
      %583 = vdwg.mxu0
      %v584 = vmax.f32 %v522, 0.0
      %v585 = vmax.f32 %v570, 0.0
      %v586 = vmax.f32 %v524, 0.0
      %v587 = vmax.f32 %v572, 0.0
      %v588 = vmax.f32 %v527, 0.0
      %v589 = vmax.f32 %v575, 0.0
      %v590 = vmax.f32 %v529, 0.0
      %v591 = vmax.f32 %v577, 0.0
      %v592 = vmax.f32 %v532, 0.0
      %v593 = vmax.f32 %v580, 0.0
      %v594 = vmax.f32 %v534, 0.0
      %v595 = vmax.f32 %v582, 0.0
      %v596 = vld [vmem:[%s3] sm:$0xf]
      %v597 = vpack.c.bf16 %v586, %v584
      %v598 = vpack.c.bf16 %v587, %v585
      %v599 = vpack.c.bf16 %v590, %v588
      %v600 = vpack.c.bf16 %v591, %v589
      %v601 = vpack.c.bf16 %v594, %v592
      %v602 = vpack.c.bf16 %v595, %v593
      %v603 = vld [vmem:[%s4] sm:$0xff]
      %605 = vset.pattern.permute.xlu0 0
      %606 = vperm.xlu0 %605, %v603
      %v607 = vpop.permute.xlu0 %606
      %vm609 = vcmask 392192
      %v611 = vsel %vm609, %v596, 0
      %613 = vmatpush.bf16.msra.mxu0 0
      %614 = vmatpush.bf16.msra.mxu0 0
      %615 = vmatpush.bf16.msra.mxu0 0
      %616 = vmatpush.bf16.msra.mxu0 0
      %617 = vmatpush.bf16.msra.mxu0 0
      %618 = vmatpush.bf16.msra.mxu0 %v601
      %619 = vmatpush.bf16.msra.mxu0 %v599
      %620 = vmatpush.bf16.msra.mxu0 %v597
      %621 = vmatmul.bf16.gmra.mxu0 %v611
      %v622 = vpop.f32.mrf.mxu0
      %v623 = vadd.f32 %v607, %v622
      %v624 = vpop.f32.mrf.mxu0
      %625 = vdwg.mxu0
      %626 = vmatpush.bf16.msra.mxu0 0
      %627 = vmatpush.bf16.msra.mxu0 0
      %628 = vmatpush.bf16.msra.mxu0 0
      %629 = vmatpush.bf16.msra.mxu0 0
      %630 = vmatpush.bf16.msra.mxu0 0
      %631 = vmatpush.bf16.msra.mxu0 %v602
      %632 = vmatpush.bf16.msra.mxu0 %v600
      %633 = vmatpush.bf16.msra.mxu0 %v598
      %634 = vmatmul.bf16.gmra.mxu0 %v611
      %v635 = vpop.f32.mrf.mxu0
      %v636 = vadd.f32 %v607, %v635
      %v637 = vpop.f32.mrf.mxu0
      %638 = vdwg.mxu0
      %v639 = vmax.f32 %v623, 0.0
      %v640 = vmax.f32 %v636, 0.0
      %641 = vst [vmem:[%s262] sm:$0xff] %v639
      %642 = vst [vmem:[%s262 + $0x8] sm:$0xff] %v640
      %s643 = smul.u32 2, %s21
      %p644 = scmp.lt.s32.totalorder %s20, 1
      %s645 = scalar_select %p644, %s20, 1
      %p646 = scmp.lt.s32.totalorder %s643, 1
      %s647 = scalar_select %p646, %s643, 1
      %s648 = smul.addr %s645, 2
      %s649 = sadd.s32 %s647, %s648
      %s650 = smul.addr %s649, 8
      %s651 = scalar_lea.vmem %s5, %s650
      // Predicated region
      $region41: #{_lambda_.1} parent=39 // pred_check
        %p652 = pneg %p160
      $region42: #{_lambda_.1} parent=39 // pred_check_branch
        %654 = sbr.rel (%p652) target = $region44
      $region43: #{_lambda_.1} parent=39 // pred_region
        %s655 = smul.u32 2, %s21
      $region44: #{_lambda_.1} parent=39 // pred_fallthru
        _
    $region40: #{_lambda_.1} parent=5 // pred_fallthru
      _
    %p656 = scmp.le.s32.totalorder 2, %s11
    // Predicated region
    $region45: #{_lambda_.1} parent=5 // pred_check
      %p657 = pneg %p656
    $region46: #{_lambda_.1} parent=5 // pred_check_branch
      %659 = sbr.rel (%p657) target = $region48
    $region47: #{_lambda_.1} parent=5 // pred_region
      %s660 = ssub.s32 %s11, 2
      // Predicated region
      $region49: #{_lambda_.1} parent=47 // pred_check
        %p661 = pneg %p166
      $region50: #{_lambda_.1} parent=47 // pred_check_branch
        %663 = sbr.rel (%p661) target = $region52
      $region51: #{_lambda_.1} parent=47 // pred_region
        %s664 = smul.u32 2, %s23
        %p665 = scmp.lt.s32.totalorder %s22, 1
        %s666 = scalar_select %p665, %s22, 1
        %p667 = scmp.lt.s32.totalorder %s664, 1
        %s668 = scalar_select %p667, %s664, 1
        %s669 = smul.addr %s666, 2
        %s670 = sadd.s32 %s668, %s669
        %s671 = smul.addr %s670, 8
        %s672 = scalar_lea.vmem %s5, %s671
      $region52: #{_lambda_.1} parent=47 // pred_fallthru
        _
    $region48: #{_lambda_.1} parent=5 // pred_fallthru
      _
  $region6: #{_lambda_.1} parent=0 // loop_footer
    %s15 = sadd.s32 1, %s11
  $region7: #{_lambda_.1} parent=0 // loop_footer_branch
    %10 = sbr.rel target = $region3
  $region8: #{_lambda_.1} parent=0 // loop_exit
    _

</llo_original>
